<compile_context>
chip_gen: v6e
topology: v6e:2x2x1
jax: 0.10.0
libtpu: 0.0.40
codegen_flags: <defaults>
</compile_context>

<pallas_src>
import functools
import math

import jax
import jax.numpy as jnp
from jax.experimental import pallas as pl
from jax.experimental.pallas import tpu as pltpu


def _round_up(a: int, b: int) -> int:
    return ((a + b - 1) // b) * b


def _cdiv(a: int, b: int) -> int:
    return (a + b - 1) // b


def _device_budget():
    """VMEM budget for tiles + scratch, plus a 'small VMEM / megacore' hint."""
    cap = 64 * 1024 * 1024                         # conservative fallback (v7x-sized)
    try:
        info = pltpu.get_tpu_info()
        cap = int(getattr(info, "vmem_capacity_bytes", cap))
    except Exception:
        pass
    budget = min((cap * 3) // 4, 100 * 1024 * 1024)  # headroom for the compiler
    budget = max(budget, 40 * 1024 * 1024)
    small_vmem = cap < 100 * 1024 * 1024             # v7x: 64 MiB VMEM, 2 TensorCores
    return budget, small_vmem


def _select_tiles(d_model, d_ff, cd_itemsize, out_itemsize, budget, small_vmem):
    """Pick (tm_target, tk).

    tm is maximized first: weights are re-streamed once per row tile (unless
    fully resident), so the kernel's FLOP/byte of weight traffic is
    ~2*tm/itemsize.  Targets: tm=1024/tk=512 on 128 MiB VMEM (v5e/v6e),
    tm=512/tk=256 on 64 MiB VMEM (v7x).  tk stays >= 256 (256-wide MXU); under
    VMEM pressure tm shrinks before tk.
    """
    if small_vmem:
        tm, tk = 512, 256
    else:
        tm, tk = 1024, 512

    def fixed(tm_):
        return (2 * tm_ * d_model * cd_itemsize      # x blocks   (double-buffered)
                + 2 * tm_ * d_model * out_itemsize   # out blocks (double-buffered)
                + tm_ * d_model * 4                  # f32 accumulator scratch
                + 2 * d_model * cd_itemsize)         # b2

    # Fully VMEM-resident weights: with tk == d_ff the weight block index never
    # changes across the grid, so Pallas fetches W1/W2/b1 exactly once.
    # (Accounted at 2x for the default double-buffer allocation.)
    full_w = 2 * (2 * d_model * d_ff + d_ff + d_model) * cd_itemsize
    if fixed(tm) + full_w <= budget:
        return tm, d_ff

    per_k = 2 * (2 * d_model + 1) * cd_itemsize      # W1 col-slab + W2 row-slab + b1
    tk = min(tk, d_ff)
    while tm > 256 and fixed(tm) + per_k * tk > budget:
        tm -= 256                                    # shrink rows first, keep tk >= 256
    while tk > 256 and fixed(tm) + per_k * tk > budget:
        tk -= 256
    while tk > 128 and fixed(tm) + per_k * tk > budget:
        tk -= 128
    if tk >= d_ff:
        tk = d_ff
    return tm, tk


def _ffn_kernel(x_ref, w1_ref, b1_ref, w2_ref, b2_ref, o_ref, acc_ref):
    k = pl.program_id(1)

    @pl.when(k == 0)
    def _init():
        # Start the accumulator from b2 so no extra epilogue add is needed.
        acc_ref[...] = jnp.broadcast_to(
            b2_ref[...].astype(jnp.float32), acc_ref.shape)

    # First matmul on a d_ff slab: (tm, d_model) @ (d_model, tk) -> (tm, tk)
    h = jnp.dot(x_ref[...], w1_ref[...], preferred_element_type=jnp.float32)
    h = jnp.maximum(h + b1_ref[...].astype(jnp.float32), 0.0)      # bias + ReLU
    # Second matmul accumulates: (tm, tk) @ (tk, d_model) -> (tm, d_model)
    acc_ref[...] += jnp.dot(h.astype(w2_ref.dtype), w2_ref[...],
                            preferred_element_type=jnp.float32)

    @pl.when(k == pl.num_programs(1) - 1)
    def _store():
        o_ref[...] = acc_ref[...].astype(o_ref.dtype)


def make_position_wise_ffn(w1, b1, w2, b2, *, compute_dtype=jnp.bfloat16,
                           row_tile=None, k_tile=None):
    """Build a jitted fn(x) computing max(0, x @ W1 + b1) @ W2 + b2.

    Weight layout is transposed vs. nn.Linear: W1 (d_model, d_ff),
    W2 (d_ff, d_model); b1 (d_ff,) or (1, d_ff); b2 (d_model,) or (1, d_model).

    The weight cast (default bf16 compute with f32 accumulation) and the d_ff
    padding are done ONCE here, not per call.  The output is cast back to
    x.dtype, matching the PyTorch module.
    """
    d_model, d_ff = w1.shape
    if w2.shape != (d_ff, d_model):
        raise ValueError(f"W2 must have shape (d_ff, d_model); got {w2.shape}")

    cd = jnp.dtype(compute_dtype) if compute_dtype is not None else jnp.dtype(w1.dtype)
    cd_itemsize = cd.itemsize
    sub = max(8, 32 // cd_itemsize)          # sublane granularity (8 f32 / 16 bf16)

    budget, small_vmem = _device_budget()
    tm_target, tk = _select_tiles(d_model, d_ff, cd_itemsize, 4, budget, small_vmem)

    if k_tile is not None:                   # validate / round user tk (128 multiple or full)
        tk = min(d_ff, max(128, _round_up(int(k_tile), 128)))
        if tk >= d_ff:
            tk = d_ff
    if row_tile is not None:
        tm_target = max(sub, _round_up(int(row_tile), sub))

    # ---- hoisted, once-per-module weight preparation (not in the per-call path)
    w1c = jnp.asarray(w1, cd)
    w2c = jnp.asarray(w2, cd)
    b1c = jnp.asarray(jnp.reshape(b1, (1, d_ff)), cd)
    b2c = jnp.asarray(jnp.reshape(b2, (1, d_model)), cd)

    d_ff_p = _round_up(d_ff, tk)
    if d_ff_p != d_ff:
        # Zero padding is mathematically inert: ReLU(0)=0 and the padded W2 rows
        # are zero, so padded d_ff columns contribute nothing.
        pad_k = d_ff_p - d_ff
        w1c = jnp.pad(w1c, ((0, 0), (0, pad_k)))
        b1c = jnp.pad(b1c, ((0, 0), (0, pad_k)))
        w2c = jnp.pad(w2c, ((0, pad_k), (0, 0)))
    num_k = d_ff_p // tk

    @jax.jit
    def _ffn(x, w1p, b1p, w2p, b2p):
        if x.shape[-1] != d_model:
            raise ValueError(f"last dim of x must be {d_model}; got {x.shape}")
        lead = x.shape[:-1]
        out_dtype = x.dtype
        m = math.prod(lead) if lead else 1

        x2d = x.reshape(m, d_model).astype(cd)

        # Row tile: as large as the budget allows (weight reuse), but keep >= 2
        # row tiles on megacore parts so both TensorCores get work.
        tm = tm_target
        if m < tm:
            tm = _round_up(m, sub)
        if small_vmem and m > sub and _cdiv(m, tm) < 2:
            tm = _round_up(_cdiv(m, 2), sub)
        m_p = _round_up(m, tm)
        if m_p != m:
            x2d = jnp.pad(x2d, ((0, m_p - m), (0, 0)))   # padded rows sliced off below

        grid = (m_p // tm, num_k)
        # Weights are re-streamed once per row tile unless fully VMEM-resident
        # (num_k == 1: block index never changes, fetched once).
        weight_passes = 1 if num_k == 1 else (m_p // tm)
        cost = pl.CostEstimate(
            flops=4 * m * d_model * d_ff,                # two matmuls, 2*M*N*K each
            transcendentals=0,
            bytes_accessed=(m * d_model * cd_itemsize                       # x read
                            + m * d_model * jnp.dtype(out_dtype).itemsize   # out write
                            + weight_passes
                            * (2 * d_model * d_ff_p + d_ff_p + d_model)
                            * cd_itemsize),                                  # weights
        )

        out2d = pl.pallas_call(
            _ffn_kernel,
            out_shape=jax.ShapeDtypeStruct((m_p, d_model), out_dtype),
            grid_spec=pltpu.PrefetchScalarGridSpec(
                num_scalar_prefetch=0,
                grid=grid,
                in_specs=[
                    pl.BlockSpec((tm, d_model), lambda i, k: (i, 0)),    # x rows
                    pl.BlockSpec((d_model, tk), lambda i, k: (0, k)),    # W1 col-slab
                    pl.BlockSpec((1, tk), lambda i, k: (0, k)),          # b1 slab
                    pl.BlockSpec((tk, d_model), lambda i, k: (k, 0)),    # W2 row-slab
                    pl.BlockSpec((1, d_model), lambda i, k: (0, 0)),     # b2
                ],
                out_specs=pl.BlockSpec((tm, d_model), lambda i, k: (i, 0)),
                scratch_shapes=[pltpu.VMEM((tm, d_model), jnp.float32)],
            ),
            compiler_params=pltpu.CompilerParams(
                dimension_semantics=("parallel", "arbitrary"),
                vmem_limit_bytes=budget,
            ),
            cost_estimate=cost,
        )(x2d, w1p, b1p, w2p, b2p)

        return out2d[:m].reshape(*lead, d_model).astype(out_dtype)

    def ffn(x):
        return _ffn(x, w1c, b1c, w2c, b2c)

    return ffn


def position_wise_ffn(x, w1, b1, w2, b2, *, compute_dtype=jnp.bfloat16,
                      row_tile=None, k_tile=None):
    """One-shot convenience wrapper.  For repeated calls with the same weights,
    prefer make_position_wise_ffn(...) so the weight cast/pad is not redone."""
    return make_position_wise_ffn(w1, b1, w2, b2, compute_dtype=compute_dtype,
                                  row_tile=row_tile, k_tile=k_tile)(x)


def init_params(key, d_model, d_ff, dtype=jnp.float32):
    """Deterministic synthetic params matching nn.Linear init, transposed layout."""
    k1, k2, k3, k4 = jax.random.split(key, 4)
    scale1 = 1.0 / jnp.sqrt(d_model)
    scale2 = 1.0 / jnp.sqrt(d_ff)
    w1 = jax.random.uniform(k1, (d_model, d_ff), dtype, minval=-scale1, maxval=scale1)
    b1 = jax.random.uniform(k2, (1, d_ff), dtype, minval=-scale1, maxval=scale1)
    w2 = jax.random.uniform(k3, (d_ff, d_model), dtype, minval=-scale2, maxval=scale2)
    b2 = jax.random.uniform(k4, (1, d_model), dtype, minval=-scale2, maxval=scale2)
    return w1, b1, w2, b2


if __name__ == "__main__":
    key = jax.random.PRNGKey(0)
    kx, kp, kx2, kp2 = jax.random.split(key, 4)

    # 1) Small shape, f32 compute, weights fully VMEM-resident (single k step).
    batch, seq, d_model, d_ff = 2, 8, 32, 64
    x = jax.random.normal(kx, (batch, seq, d_model), jnp.float32)
    w1, b1, w2, b2 = init_params(kp, d_model, d_ff)

    ffn_f32 = make_position_wise_ffn(w1, b1, w2, b2, compute_dtype=None)
    out = jax.block_until_ready(ffn_f32(x))
    ref = jnp.maximum(x @ w1 + b1, 0.0) @ w2 + b2
    assert out.shape == (batch, seq, d_model) and out.dtype == x.dtype
    assert jnp.allclose(out, ref, atol=1e-5, rtol=1e-5)

    # 2) Ragged rows + forced multi-step d_ff slab reduction (exercises padding,
    #    k-accumulation and the pl.when init/finalize), f32 for a tight check.
    batch2, seq2, d_model2, d_ff2 = 3, 7, 128, 640
    x2 = jax.random.normal(kx2, (batch2, seq2, d_model2), jnp.float32)
    w1b, b1b, w2b, b2b = init_params(kp2, d_model2, d_ff2)

    ffn_slab = make_position_wise_ffn(w1b, b1b, w2b, b2b,
                                      compute_dtype=None, k_tile=256, row_tile=16)
    out2 = jax.block_until_ready(ffn_slab(x2))
    ref2 = jnp.maximum(x2 @ w1b + b1b, 0.0) @ w2b + b2b
    assert out2.shape == (batch2, seq2, d_model2)
    assert jnp.allclose(out2, ref2, atol=1e-4, rtol=1e-4)

    # 3) Default path: bf16 compute / f32 accumulate, output cast back to x dtype.
    ffn_bf16 = make_position_wise_ffn(w1b, b1b, w2b, b2b)   # bf16 compute by default
    out3 = jax.block_until_ready(ffn_bf16(x2))
    assert out3.dtype == x2.dtype
    assert jnp.allclose(out3, ref2, atol=3e-2, rtol=3e-2)

    print("KERNEL_OK")
</pallas_src>

<mosaic_0001>
module attributes {stable_mosaic.version = 11 : i64} {
  func.func @_ffn_kernel(%arg0: i32, %arg1: i32, %arg2: memref<8x32xf32, #tpu.memory_space<vmem>>, %arg3: memref<32x64xf32, #tpu.memory_space<vmem>>, %arg4: memref<1x64xf32, #tpu.memory_space<vmem>>, %arg5: memref<64x32xf32, #tpu.memory_space<vmem>>, %arg6: memref<1x32xf32, #tpu.memory_space<vmem>>, %arg7: memref<8x32xf32, #tpu.memory_space<vmem>>, %arg8: memref<8x32xf32, #tpu.memory_space<vmem>>) attributes {dimension_semantics = [#tpu.dimension_semantics<parallel>, #tpu.dimension_semantics<arbitrary>], iteration_bounds = array<i64: 2, 1>, scalar_prefetch = 0 : i64, scratch_operands = 1 : i64, tpu.core_type = #tpu.core_type<tc>, window_params = [{transform_indices = @transform_0, window_bounds = array<i64: 8, 32>}, {transform_indices = @transform_1, window_bounds = array<i64: 32, 64>}, {transform_indices = @transform_2, window_bounds = array<i64: 1, 64>}, {transform_indices = @transform_3, window_bounds = array<i64: 64, 32>}, {pipeline_mode = #tpu.pipeline_mode<synchronous>, transform_indices = @transform_4, window_bounds = array<i64: 1, 32>}, {transform_indices = @transform_5, window_bounds = array<i64: 8, 32>}]} {
    %c0_i32 = arith.constant 0 : i32
    %0 = arith.cmpi eq, %arg1, %c0_i32 : i32
    %1 = arith.extui %0 : i1 to i32
    %c0_i32_0 = arith.constant 0 : i32
    %2 = arith.cmpi ne, %1, %c0_i32_0 : i32
    scf.if %2 {
      %c0_16 = arith.constant 0 : index
      %c0_17 = arith.constant 0 : index
      %19 = vector.load %arg6[%c0_16, %c0_17] : memref<1x32xf32, #tpu.memory_space<vmem>>, vector<1x32xf32>
      %20 = vector.shape_cast %19 : vector<1x32xf32> to vector<1x32xf32>
      %21 = vector.broadcast %20 : vector<1x32xf32> to vector<8x32xf32>
      %c0_18 = arith.constant 0 : index
      %c0_19 = arith.constant 0 : index
      %22 = vector.load %arg8[%c0_18, %c0_19] : memref<8x32xf32, #tpu.memory_space<vmem>>, vector<8x32xf32>
      tpu.vector_store %arg8[%c0_18, %c0_19], %21 {strides = array<i32>} : memref<8x32xf32, #tpu.memory_space<vmem>>, vector<8x32xf32>,
    } else {
    }
    %c0 = arith.constant 0 : index
    %c0_1 = arith.constant 0 : index
    %3 = vector.load %arg2[%c0, %c0_1] : memref<8x32xf32, #tpu.memory_space<vmem>>, vector<8x32xf32>
    %c0_2 = arith.constant 0 : index
    %c0_3 = arith.constant 0 : index
    %4 = vector.load %arg3[%c0_2, %c0_3] : memref<32x64xf32, #tpu.memory_space<vmem>>, vector<32x64xf32>
    %cst = arith.constant dense<0.000000e+00> : vector<8x64xf32>
    %5 = tpu.matmul %3, %4, %cst {dimension_numbers = #tpu.dot_dimension_numbers<[1], [0], [0], [1], [0, 0, 1, 1], [], []>} : vector<8x32xf32>, vector<32x64xf32>, vector<8x64xf32> -> vector<8x64xf32>
    %c0_4 = arith.constant 0 : index
    %c0_5 = arith.constant 0 : index
    %6 = vector.load %arg4[%c0_4, %c0_5] : memref<1x64xf32, #tpu.memory_space<vmem>>, vector<1x64xf32>
    %7 = vector.broadcast %6 : vector<1x64xf32> to vector<8x64xf32>
    %8 = arith.addf %5, %7 : vector<8x64xf32>
    %cst_6 = arith.constant 0.000000e+00 : f32
    %9 = vector.broadcast %cst_6 : f32 to vector<8x64xf32>
    %10 = arith.maximumf %8, %9 : vector<8x64xf32>
    %c0_7 = arith.constant 0 : index
    %c0_8 = arith.constant 0 : index
    %11 = vector.load %arg8[%c0_7, %c0_8] : memref<8x32xf32, #tpu.memory_space<vmem>>, vector<8x32xf32>
    %c0_9 = arith.constant 0 : index
    %c0_10 = arith.constant 0 : index
    %12 = vector.load %arg5[%c0_9, %c0_10] : memref<64x32xf32, #tpu.memory_space<vmem>>, vector<64x32xf32>
    %cst_11 = arith.constant dense<0.000000e+00> : vector<8x32xf32>
    %13 = tpu.matmul %10, %12, %cst_11 {dimension_numbers = #tpu.dot_dimension_numbers<[1], [0], [0], [1], [0, 0, 1, 1], [], []>} : vector<8x64xf32>, vector<64x32xf32>, vector<8x32xf32> -> vector<8x32xf32>
    %14 = arith.addf %11, %13 : vector<8x32xf32>
    %c0_12 = arith.constant 0 : index
    %c0_13 = arith.constant 0 : index
    %15 = vector.load %arg8[%c0_12, %c0_13] : memref<8x32xf32, #tpu.memory_space<vmem>>, vector<8x32xf32>
    tpu.vector_store %arg8[%c0_12, %c0_13], %14 {strides = array<i32>} : memref<8x32xf32, #tpu.memory_space<vmem>>, vector<8x32xf32>,
    %c0_i32_14 = arith.constant 0 : i32
    %16 = arith.cmpi eq, %arg1, %c0_i32_14 : i32
    %17 = arith.extui %16 : i1 to i32
    %c0_i32_15 = arith.constant 0 : i32
    %18 = arith.cmpi ne, %17, %c0_i32_15 : i32
    scf.if %18 {
      %c0_16 = arith.constant 0 : index
      %c0_17 = arith.constant 0 : index
      %19 = vector.load %arg8[%c0_16, %c0_17] : memref<8x32xf32, #tpu.memory_space<vmem>>, vector<8x32xf32>
      %c0_18 = arith.constant 0 : index
      %c0_19 = arith.constant 0 : index
      %20 = vector.load %arg7[%c0_18, %c0_19] : memref<8x32xf32, #tpu.memory_space<vmem>>, vector<8x32xf32>
      tpu.vector_store %arg7[%c0_18, %c0_19], %19 {strides = array<i32>} : memref<8x32xf32, #tpu.memory_space<vmem>>, vector<8x32xf32>,
    } else {
    }
    return
  }
  func.func @transform_0(%arg0: i32, %arg1: i32) -> (i32, i32) {
    %c0_i32 = arith.constant 0 : i32
    %c0_i32_0 = arith.constant 0 : i32
    return %arg0, %c0_i32 : i32, i32
  }
  func.func @transform_1(%arg0: i32, %arg1: i32) -> (i32, i32) {
    %c0_i32 = arith.constant 0 : i32
    %c0_i32_0 = arith.constant 0 : i32
    return %c0_i32, %arg1 : i32, i32
  }
  func.func @transform_2(%arg0: i32, %arg1: i32) -> (i32, i32) {
    %c0_i32 = arith.constant 0 : i32
    %c0_i32_0 = arith.constant 0 : i32
    return %c0_i32, %arg1 : i32, i32
  }
  func.func @transform_3(%arg0: i32, %arg1: i32) -> (i32, i32) {
    %c0_i32 = arith.constant 0 : i32
    %c0_i32_0 = arith.constant 0 : i32
    return %arg1, %c0_i32 : i32, i32
  }
  func.func @transform_4(%arg0: i32, %arg1: i32) -> (i32, i32) {
    %c0_i32 = arith.constant 0 : i32
    %c0_i32_0 = arith.constant 0 : i32
    %c0_i32_1 = arith.constant 0 : i32
    return %c0_i32, %c0_i32_0 : i32, i32
  }
  func.func @transform_5(%arg0: i32, %arg1: i32) -> (i32, i32) {
    %c0_i32 = arith.constant 0 : i32
    %c0_i32_0 = arith.constant 0 : i32
    return %arg0, %c0_i32 : i32, i32
  }
}

</mosaic_0001>

<llo_original>
// kernel: _ffn.1
$region0: #{_ffn.1}
  #allocation0 [shape = 'u32[]', space=smem, size = 0x4, offset = 0x4, fixed_abs, tag = 'smem constant byte address 0x4 - core index']
  #allocation1 [shape = 'u32[144,128]{1,0:T(1,128)}', space=vmem, size = 0x12000, scoped, tag = 'internal scratch']
  #allocation2 [shape = 'f32[8,32]{1,0:T(8,128)}', space=vmem, size = 0x1000, scoped, tag = 'scratch operand']
  %s0 = inlined_call_operand.vmem [shape: f32[16,32], index: 0, kind: input, shape index: {}]
  %s1 = inlined_call_operand.vmem [shape: f32[32,64], index: 1, kind: input, shape index: {}]
  %s2 = inlined_call_operand.vmem [shape: f32[1,64], index: 2, kind: input, shape index: {}]
  %s3 = inlined_call_operand.vmem [shape: f32[64,32], index: 3, kind: input, shape index: {}]
  %s4 = inlined_call_operand.vmem [shape: f32[1,32], index: 4, kind: input, shape index: {}]
  %s5 = inlined_call_operand.hbm [shape: f32[16,32], index: 5, kind: output, shape index: {}]
  %s6 = sld [smem:[#allocation0]]
  $region61: #{_ffn.1} parent=0
    _
  %s8 = ssub.s32 1, %s6
  %s9 = scalar_select 0, %s8, %s6
  $region1: #{_ffn.1} parent=0
    #allocation3 [shape = 'u8[8192]{0}', space=vmem, size = 0x2000, scoped, tag = 'output window, operand 0']
    #allocation4 [shape = 's32[2]{0}', space=sflag, size = 0x8, scoped, tag = 'scoped memory for _ffn.1']
    %10 = vsyncpa [#allocation4], 0
    %s11 = scalar_lea.sflag [#allocation4], 1
    %12 = vsyncpa %s11, 0
    loop: start=0, step=1, limit=4
    $region2: #{_ffn.1} parent=1 // loop_pre_header
      _
    $region3: #{_ffn.1} parent=1 // loop_header
      %s14 = sphi 0, %s18
      %p15 = scmp.ge.s32.totalorder %s14, 4
      %s21 = sphi 0, %s33
      %s22 = sphi 0, %s29
      %s23 = sphi 0, %s21
      %s24 = sphi 0, %s22
      %s25 = sphi 0, %s23
      %s26 = sphi 0, %s24
      %s36 = sphi 0, %s38
      %s39 = sphi 0, %s36
      %s40 = sphi 0, %s39
      %s56 = sphi 0, %s40
      %s62 = sphi 0, %s64
      %s65 = sphi 0, %s62
      %s66 = sphi 0, %s65
      %s82 = sphi 0, %s66
      %s88 = sphi 0, %s90
      %s91 = sphi 0, %s88
      %s92 = sphi 0, %s91
      %s108 = sphi 0, %s92
      %s114 = sphi 0, %s116
      %s117 = sphi 0, %s114
      %s118 = sphi 0, %s117
      %s134 = sphi 0, %s118
      %s138 = sphi 0, %s138
      %s140 = sphi 0, %s138
      %s141 = sphi 0, %s140
      %s155 = sphi 0, %s141
      %s161 = sphi 0, %s163
      %s164 = sphi 0, %s161
      %s165 = sphi 0, %s164
      %s181 = sphi 0, %s165
    $region4: #{_ffn.1} parent=1 // loop_header_branch
      %17 = sbr.rel (%p15) target = $region8
    $region5: #{_ffn.1} parent=1 // loop_body
      %s19 = ssub.s32 %s14, 1
      %s20 = ssub.s32 %s14, 2
      %s27 = sadd.s32 1, %s22
      %p28 = scmp.ge.s32.totalorder %s27, 1
      %s29 = scalar_select %p28, 0, %s27
      %s30 = sadd.s32 1, %s21
      %s31 = scalar_select %p28, %s30, %s21
      %p32 = scmp.ge.s32.totalorder %s31, 2
      %s33 = scalar_select %p32, 0, %s31
      %s34 = ssub.s32 %s21, %s33
      %p35 = scmp.eq.s32.totalorder %s34, 0
      %s37 = sadd.s32 %s36, 1
      %s38 = scalar_select %p35, %s36, %s37
      %p41 = pneg %p35
      %p42 = scmp.eq.s32.totalorder %s14, 1
      %p43 = por %p41, %p42
      %p44 = scmp.ne.s32.totalorder %s36, %s39
      %p45 = scmp.eq.s32.totalorder %s14, 0
      %p46 = por %p44, %p45
      %p47 = scmp.ne.s32.totalorder %s36, %s39
      %p48 = scmp.eq.s32.totalorder %s19, 1
      %p49 = por %p47, %p48
      %p50 = scmp.ne.s32.totalorder %s39, %s40
      %p51 = scmp.eq.s32.totalorder %s19, 0
      %p52 = por %p50, %p51
      %p53 = scmp.ne.s32.totalorder %s39, %s40
      %p54 = scmp.eq.s32.totalorder %s20, 1
      %p55 = por %p53, %p54
      %p57 = scmp.ne.s32.totalorder %s40, %s56
      %p58 = scmp.eq.s32.totalorder %s20, 0
      %p59 = por %p57, %p58
      %s60 = ssub.s32 %s22, %s29
      %p61 = scmp.eq.s32.totalorder %s60, 0
      %s63 = sadd.s32 %s62, 1
      %s64 = scalar_select %p61, %s62, %s63
      %p67 = pneg %p61
      %p68 = scmp.eq.s32.totalorder %s14, 1
      %p69 = por %p67, %p68
      %p70 = scmp.ne.s32.totalorder %s62, %s65
      %p71 = scmp.eq.s32.totalorder %s14, 0
      %p72 = por %p70, %p71
      %p73 = scmp.ne.s32.totalorder %s62, %s65
      %p74 = scmp.eq.s32.totalorder %s19, 1
      %p75 = por %p73, %p74
      %p76 = scmp.ne.s32.totalorder %s65, %s66
      %p77 = scmp.eq.s32.totalorder %s19, 0
      %p78 = por %p76, %p77
      %p79 = scmp.ne.s32.totalorder %s65, %s66
      %p80 = scmp.eq.s32.totalorder %s20, 1
      %p81 = por %p79, %p80
      %p83 = scmp.ne.s32.totalorder %s66, %s82
      %p84 = scmp.eq.s32.totalorder %s20, 0
      %p85 = por %p83, %p84
      %s86 = ssub.s32 %s22, %s29
      %p87 = scmp.eq.s32.totalorder %s86, 0
      %s89 = sadd.s32 %s88, 1
      %s90 = scalar_select %p87, %s88, %s89
      %p93 = pneg %p87
      %p94 = scmp.eq.s32.totalorder %s14, 1
      %p95 = por %p93, %p94
      %p96 = scmp.ne.s32.totalorder %s88, %s91
      %p97 = scmp.eq.s32.totalorder %s14, 0
      %p98 = por %p96, %p97
      %p99 = scmp.ne.s32.totalorder %s88, %s91
      %p100 = scmp.eq.s32.totalorder %s19, 1
      %p101 = por %p99, %p100
      %p102 = scmp.ne.s32.totalorder %s91, %s92
      %p103 = scmp.eq.s32.totalorder %s19, 0
      %p104 = por %p102, %p103
      %p105 = scmp.ne.s32.totalorder %s91, %s92
      %p106 = scmp.eq.s32.totalorder %s20, 1
      %p107 = por %p105, %p106
      %p109 = scmp.ne.s32.totalorder %s92, %s108
      %p110 = scmp.eq.s32.totalorder %s20, 0
      %p111 = por %p109, %p110
      %s112 = ssub.s32 %s22, %s29
      %p113 = scmp.eq.s32.totalorder %s112, 0
      %s115 = sadd.s32 %s114, 1
      %s116 = scalar_select %p113, %s114, %s115
      %p119 = pneg %p113
      %p120 = scmp.eq.s32.totalorder %s14, 1
      %p121 = por %p119, %p120
      %p122 = scmp.ne.s32.totalorder %s114, %s117
      %p123 = scmp.eq.s32.totalorder %s14, 0
      %p124 = por %p122, %p123
      %p125 = scmp.ne.s32.totalorder %s114, %s117
      %p126 = scmp.eq.s32.totalorder %s19, 1
      %p127 = por %p125, %p126
      %p128 = scmp.ne.s32.totalorder %s117, %s118
      %p129 = scmp.eq.s32.totalorder %s19, 0
      %p130 = por %p128, %p129
      %p131 = scmp.ne.s32.totalorder %s117, %s118
      %p132 = scmp.eq.s32.totalorder %s20, 1
      %p133 = por %p131, %p132
      %p135 = scmp.ne.s32.totalorder %s118, %s134
      %p136 = scmp.eq.s32.totalorder %s20, 0
      %p137 = por %p135, %p136
      %s139 = sadd.s32 %s138, 1
      %p142 = scmp.eq.s32.totalorder %s14, 1
      %p143 = scmp.ne.s32.totalorder %s138, %s140
      %p144 = scmp.eq.s32.totalorder %s14, 0
      %p145 = por %p143, %p144
      %p146 = scmp.ne.s32.totalorder %s138, %s140
      %p147 = scmp.eq.s32.totalorder %s19, 1
      %p148 = por %p146, %p147
      %p149 = scmp.ne.s32.totalorder %s140, %s141
      %p150 = scmp.eq.s32.totalorder %s19, 0
      %p151 = por %p149, %p150
      %p152 = scmp.ne.s32.totalorder %s140, %s141
      %p153 = scmp.eq.s32.totalorder %s20, 1
      %p154 = por %p152, %p153
      %p156 = scmp.ne.s32.totalorder %s141, %s155
      %p157 = scmp.eq.s32.totalorder %s20, 0
      %p158 = por %p156, %p157
      %s159 = ssub.s32 %s21, %s33
      %p160 = scmp.eq.s32.totalorder %s159, 0
      %s162 = sadd.s32 %s161, 1
      %s163 = scalar_select %p160, %s161, %s162
      %p166 = pneg %p160
      %p167 = scmp.eq.s32.totalorder %s14, 1
      %p168 = por %p166, %p167
      %p169 = scmp.ne.s32.totalorder %s161, %s164
      %p170 = scmp.eq.s32.totalorder %s14, 0
      %p171 = por %p169, %p170
      %p172 = scmp.ne.s32.totalorder %s161, %s164
      %p173 = scmp.eq.s32.totalorder %s19, 1
      %p174 = por %p172, %p173
      %p175 = scmp.ne.s32.totalorder %s164, %s165
      %p176 = scmp.eq.s32.totalorder %s19, 0
      %p177 = por %p175, %p176
      %p178 = scmp.ne.s32.totalorder %s164, %s165
      %p179 = scmp.eq.s32.totalorder %s20, 1
      %p180 = por %p178, %p179
      %p182 = scmp.ne.s32.totalorder %s165, %s181
      %p183 = scmp.eq.s32.totalorder %s20, 0
      %p184 = por %p182, %p183
      %p185 = scmp.le.s32.totalorder 1, %s14
      %p186 = scmp.lt.s32.totalorder %s14, 3
      %p187 = pnand %p185, %p186
      %p188 = pneg %p187
      // Predicated region
      $region9: #{_ffn.1} parent=5 // pred_check
        _
      $region10: #{_ffn.1} parent=5 // pred_check_branch
        %190 = sbr.rel (%p187) target = $region12
      $region11: #{_ffn.1} parent=5 // pred_region
        %s191 = ssub.s32 %s14, 1
        // Predicated region
        $region13: #{_ffn.1} parent=11 // pred_check
          %p192 = pneg %p78
        $region14: #{_ffn.1} parent=11 // pred_check_branch
          %194 = sbr.rel (%p192) target = $region16
        $region15: #{_ffn.1} parent=11 // pred_region
          %p195 = scmp.lt.s32.totalorder %s24, 0
          %s196 = scalar_select %p195, %s24, 0
          %s197 = smul.addr %s196, 8
          %s198 = scalar_lea.vmem %s1, %s197
        $region16: #{_ffn.1} parent=11 // pred_fallthru
          _
        // Predicated region
        $region17: #{_ffn.1} parent=11 // pred_check
          %p199 = pneg %p104
        $region18: #{_ffn.1} parent=11 // pred_check_branch
          %201 = sbr.rel (%p199) target = $region20
        $region19: #{_ffn.1} parent=11 // pred_region
          %p202 = scmp.lt.s32.totalorder %s24, 0
          %s203 = scalar_select %p202, %s24, 0
          %s204 = scalar_lea.vmem %s2, %s203
        $region20: #{_ffn.1} parent=11 // pred_fallthru
          _
        // Predicated region
        $region21: #{_ffn.1} parent=11 // pred_check
          %p205 = pneg %p130
        $region22: #{_ffn.1} parent=11 // pred_check_branch
          %207 = sbr.rel (%p205) target = $region24
        $region23: #{_ffn.1} parent=11 // pred_region
          %s208 = smul.u32 8, %s24
          %p209 = scmp.lt.s32.totalorder %s208, 7
          %s210 = scalar_select %p209, %s208, 7
          %s211 = smul.addr %s210, 8
          %s212 = scalar_lea.vmem %s3, %s211
          %s213 = smul.u32 8, %s24
        $region24: #{_ffn.1} parent=11 // pred_fallthru
          _
        // Predicated region
        $region25: #{_ffn.1} parent=11 // pred_check
          %p214 = pneg %p151
        $region26: #{_ffn.1} parent=11 // pred_check_branch
          %216 = sbr.rel (%p214) target = $region28
        $region27: #{_ffn.1} parent=11 // pred_region
          _
        $region28: #{_ffn.1} parent=11 // pred_fallthru
          _
      $region12: #{_ffn.1} parent=5 // pred_fallthru
        _
      %p217 = scmp.lt.s32.totalorder %s14, 2
      // Predicated region
      $region29: #{_ffn.1} parent=5 // pred_check
        %p218 = pneg %p217
      $region30: #{_ffn.1} parent=5 // pred_check_branch
        %220 = sbr.rel (%p218) target = $region32
      $region31: #{_ffn.1} parent=5 // pred_region
        // Predicated region
        $region33: #{_ffn.1} parent=31 // pred_check
          %p221 = pneg %p46
        $region34: #{_ffn.1} parent=31 // pred_check_branch
          %223 = sbr.rel (%p221) target = $region36
        $region35: #{_ffn.1} parent=31 // pred_region
          %p224 = scmp.lt.s32.totalorder %s21, 1
          %s225 = scalar_select %p224, %s21, 1
          %s226 = smul.addr %s225, 8
          %s227 = scalar_lea.vmem %s0, %s226
        $region36: #{_ffn.1} parent=31 // pred_fallthru
          _
      $region32: #{_ffn.1} parent=5 // pred_fallthru
        _
      %p228 = scmp.le.s32.totalorder 1, %s14
      %p229 = scmp.lt.s32.totalorder %s14, 3
      %p230 = pnand %p228, %p229
      %p231 = pneg %p230
      // Predicated region
      $region37: #{_ffn.1} parent=5 // pred_check
        _
      $region38: #{_ffn.1} parent=5 // pred_check_branch
        %233 = sbr.rel (%p230) target = $region40
      $region39: #{_ffn.1} parent=5 // pred_region
        %s234 = ssub.s32 %s14, 1
        %p235 = scmp.lt.s32.totalorder %s23, 1
        %s236 = scalar_select %p235, %s23, 1
        %s237 = smul.addr %s236, 8
        %s238 = scalar_lea.vmem %s0, %s237
        %p239 = pneg %p52
        %p240 = pneg %p49
        %p241 = scmp.lt.s32.totalorder %s24, 0
        %s242 = scalar_select %p241, %s24, 0
        %s243 = smul.addr %s242, 8
        %s244 = scalar_lea.vmem %s1, %s243
        %p245 = pneg %p78
        %p246 = pneg %p75
        %p247 = scmp.lt.s32.totalorder %s24, 0
        %s248 = scalar_select %p247, %s24, 0
        %s249 = scalar_lea.vmem %s2, %s248
        %p250 = pneg %p104
        %p251 = pneg %p101
        %s252 = smul.u32 8, %s24
        %p253 = scmp.lt.s32.totalorder %s252, 7
        %s254 = scalar_select %p253, %s252, 7
        %s255 = smul.addr %s254, 8
        %s256 = scalar_lea.vmem %s3, %s255
        %p257 = pneg %p130
        %p258 = pneg %p127
        %p259 = pneg %p151
        %p260 = pneg %p148
        %p261 = pneg %p177
        %p262 = pneg %p174
        %s263 = sand.u32 %s164, 1
        %s264 = scalar_lea.sflag [#allocation4], %s263
        %s265 = sand.u32 %s164, 1
        %s266 = smul.addr %s265, 8
        %s267 = scalar_lea.vmem [#allocation3], %s266
        %p268 = scmp.lt.s32.totalorder %s23, 1
        %s269 = scalar_select %p268, %s23, 1
        %s270 = smul.addr %s269, 8
        %s271 = scalar_lea.vmem %s0, %s270
        %p272 = scmp.lt.s32.totalorder %s24, 0
        %s273 = scalar_select %p272, %s24, 0
        %s274 = smul.addr %s273, 8
        %s275 = scalar_lea.vmem %s1, %s274
        %p276 = scmp.lt.s32.totalorder %s24, 0
        %s277 = scalar_select %p276, %s24, 0
        %s278 = scalar_lea.vmem %s2, %s277
        %s279 = smul.u32 8, %s24
        %p280 = scmp.lt.s32.totalorder %s279, 7
        %s281 = scalar_select %p280, %s279, 7
        %s282 = smul.addr %s281, 8
        %s283 = scalar_lea.vmem %s3, %s282
        %s284 = smul.u32 8, %s24
        %p285 = scmp.eq.s32.totalorder %s24, 0
        // Predicated region
        $region41: #{_ffn.1} parent=39 // pred_check
          %p286 = pneg %p285
        $region42: #{_ffn.1} parent=39 // pred_check_branch
          %288 = sbr.rel (%p286) target = $region44
        $region43: #{_ffn.1} parent=39 // pred_region
          %v289 = vld [vmem:[%s4] sm:$0x1]
          %v291 = vlaneseq
          %v292 = vshrl.u32 %v291, 7
          %v293 = vsub.s32 0, %v292
          %v294 = vrot.slane %v289, %v293
          %vm296 = vcmask 261120
          %297 = vst.msk [vmem:[#allocation2] sm:$0xff] %vm296, %v294
        $region44: #{_ffn.1} parent=39 // pred_fallthru
          _
        %v298 = vld [vmem:[%s271] sm:$0xff]
        %v299 = vld [vmem:[%s275] sm:$0xff]
        %v300 = vld [vmem:[%s275 + $0x8] sm:$0xff]
        %v301 = vld [vmem:[%s275 + $0x10] sm:$0xff]
        %v302 = vld [vmem:[%s275 + $0x18] sm:$0xff]
        %v303 = vld [vmem:[%s278] sm:$0x1]
        %v305 = vlaneseq
        %v306 = vshrl.u32 %v305, 7
        %v307 = vsub.s32 0, %v306
        %v308 = vrot.slane %v303, %v307
        %vm310 = vcmask 261120
        %v312 = vsel %vm310, %v298, 0
        %314 = vmatprep.subr.mxu0 0.0
        %315 = vmatpush1.msra.mxu0 0.0
        %316 = vmatprep.subr.mxu0 0.0
        %317 = vmatpush1.msra.mxu0 0.0
        %318 = vmatprep.subr.mxu0 0.0
        %319 = vmatpush1.msra.mxu0 0.0
        %320 = vmatprep.subr.mxu0 0.0
        %321 = vmatpush1.msra.mxu0 0.0
        %322 = vmatprep.subr.mxu0 0.0
        %323 = vmatpush1.msra.mxu0 0.0
        %324 = vmatprep.subr.mxu0 0.0
        %325 = vmatpush1.msra.mxu0 0.0
        %326 = vmatprep.subr.mxu0 0.0
        %327 = vmatpush1.msra.mxu0 0.0
        %328 = vmatprep.subr.mxu0 0.0
        %329 = vmatpush1.msra.mxu0 0.0
        %330 = vmatprep.subr.mxu0 0.0
        %331 = vmatpush1.msra.mxu0 0.0
        %332 = vmatprep.subr.mxu0 0.0
        %333 = vmatpush1.msra.mxu0 0.0
        %334 = vmatprep.subr.mxu0 0.0
        %335 = vmatpush1.msra.mxu0 0.0
        %336 = vmatprep.subr.mxu0 0.0
        %337 = vmatpush1.msra.mxu0 0.0
        %338 = vmatprep.subr.mxu0 0.0
        %339 = vmatpush1.msra.mxu0 %v302
        %340 = vmatprep.subr.mxu0 0.0
        %341 = vmatpush1.msra.mxu0 %v301
        %342 = vmatprep.subr.mxu0 0.0
        %343 = vmatpush1.msra.mxu0 %v300
        %344 = vmatprep.subr.mxu0 0.0
        %345 = vmatpush1.msra.mxu0 %v299
        %346 = vmatprep.subr.mxu0 0.0
        %347 = vmatpush2.msra.mxu0 0.0
        %348 = vmatprep.subr.mxu0 0.0
        %349 = vmatpush2.msra.mxu0 0.0
        %350 = vmatprep.subr.mxu0 0.0
        %351 = vmatpush2.msra.mxu0 0.0
        %352 = vmatprep.subr.mxu0 0.0
        %353 = vmatpush2.msra.mxu0 0.0
        %354 = vmatprep.subr.mxu0 0.0
        %355 = vmatpush2.msra.mxu0 0.0
        %356 = vmatprep.subr.mxu0 0.0
        %357 = vmatpush2.msra.mxu0 0.0
        %358 = vmatprep.subr.mxu0 0.0
        %359 = vmatpush2.msra.mxu0 0.0
        %360 = vmatprep.subr.mxu0 0.0
        %361 = vmatpush2.msra.mxu0 0.0
        %362 = vmatprep.subr.mxu0 0.0
        %363 = vmatpush2.msra.mxu0 0.0
        %364 = vmatprep.subr.mxu0 0.0
        %365 = vmatpush2.msra.mxu0 0.0
        %366 = vmatprep.subr.mxu0 0.0
        %367 = vmatpush2.msra.mxu0 0.0
        %368 = vmatprep.subr.mxu0 0.0
        %369 = vmatpush2.msra.mxu0 0.0
        %370 = vmatprep.subr.mxu0 0.0
        %371 = vmatpush2.msra.mxu0 0.0
        %372 = vmatprep.subr.mxu0 0.0
        %373 = vmatpush2.msra.mxu0 0.0
        %374 = vmatprep.subr.mxu0 0.0
        %375 = vmatpush2.msra.mxu0 0.0
        %376 = vmatprep.subr.mxu0 0.0
        %377 = vmatpush2.msra.mxu0 0.0
        %378 = vmatprep.mubr.f32.mxu0 0.0
        %379 = vmatmul.mubr.f32.gmra.mxu0 %v312
        %v380 = vpop.f32.mrf.mxu0
        %v381 = vadd.f32 %v308, %v380
        %v382 = vpop.f32.mrf.mxu0
        %383 = vdwg.mxu0
        %v384 = vmax.f32 %v381, 0.0
        %v385 = vld [vmem:[#allocation2] sm:$0xff]
        %v386 = vld [vmem:[%s283] sm:$0xff]
        %v387 = vld [vmem:[%s283 + $0x8] sm:$0xff]
        %v388 = vld [vmem:[%s283 + $0x10] sm:$0xff]
        %v389 = vld [vmem:[%s283 + $0x18] sm:$0xff]
        %v390 = vld [vmem:[%s283 + $0x20] sm:$0xff]
        %v391 = vld [vmem:[%s283 + $0x28] sm:$0xff]
        %v392 = vld [vmem:[%s283 + $0x30] sm:$0xff]
        %v393 = vld [vmem:[%s283 + $0x38] sm:$0xff]
        %vm394 = vcmask 523264
        %v396 = vsel %vm394, %v384, 0
        %398 = vmatprep.subr.mxu0 0.0
        %399 = vmatpush1.msra.mxu0 0.0
        %400 = vmatprep.subr.mxu0 0.0
        %401 = vmatpush1.msra.mxu0 0.0
        %402 = vmatprep.subr.mxu0 0.0
        %403 = vmatpush1.msra.mxu0 0.0
        %404 = vmatprep.subr.mxu0 0.0
        %405 = vmatpush1.msra.mxu0 0.0
        %406 = vmatprep.subr.mxu0 0.0
        %407 = vmatpush1.msra.mxu0 0.0
        %408 = vmatprep.subr.mxu0 0.0
        %409 = vmatpush1.msra.mxu0 0.0
        %410 = vmatprep.subr.mxu0 0.0
        %411 = vmatpush1.msra.mxu0 0.0
        %412 = vmatprep.subr.mxu0 0.0
        %413 = vmatpush1.msra.mxu0 0.0
        %414 = vmatprep.subr.mxu0 0.0
        %415 = vmatpush1.msra.mxu0 %v393
        %416 = vmatprep.subr.mxu0 0.0
        %417 = vmatpush1.msra.mxu0 %v392
        %418 = vmatprep.subr.mxu0 0.0
        %419 = vmatpush1.msra.mxu0 %v391
        %420 = vmatprep.subr.mxu0 0.0
        %421 = vmatpush1.msra.mxu0 %v390
        %422 = vmatprep.subr.mxu0 0.0
        %423 = vmatpush1.msra.mxu0 %v389
        %424 = vmatprep.subr.mxu0 0.0
        %425 = vmatpush1.msra.mxu0 %v388
        %426 = vmatprep.subr.mxu0 0.0
        %427 = vmatpush1.msra.mxu0 %v387
        %428 = vmatprep.subr.mxu0 0.0
        %429 = vmatpush1.msra.mxu0 %v386
        %430 = vmatprep.subr.mxu0 0.0
        %431 = vmatpush2.msra.mxu0 0.0
        %432 = vmatprep.subr.mxu0 0.0
        %433 = vmatpush2.msra.mxu0 0.0
        %434 = vmatprep.subr.mxu0 0.0
        %435 = vmatpush2.msra.mxu0 0.0
        %436 = vmatprep.subr.mxu0 0.0
        %437 = vmatpush2.msra.mxu0 0.0
        %438 = vmatprep.subr.mxu0 0.0
        %439 = vmatpush2.msra.mxu0 0.0
        %440 = vmatprep.subr.mxu0 0.0
        %441 = vmatpush2.msra.mxu0 0.0
        %442 = vmatprep.subr.mxu0 0.0
        %443 = vmatpush2.msra.mxu0 0.0
        %444 = vmatprep.subr.mxu0 0.0
        %445 = vmatpush2.msra.mxu0 0.0
        %446 = vmatprep.subr.mxu0 0.0
        %447 = vmatpush2.msra.mxu0 0.0
        %448 = vmatprep.subr.mxu0 0.0
        %449 = vmatpush2.msra.mxu0 0.0
        %450 = vmatprep.subr.mxu0 0.0
        %451 = vmatpush2.msra.mxu0 0.0
        %452 = vmatprep.subr.mxu0 0.0
        %453 = vmatpush2.msra.mxu0 0.0
        %454 = vmatprep.subr.mxu0 0.0
        %455 = vmatpush2.msra.mxu0 0.0
        %456 = vmatprep.subr.mxu0 0.0
        %457 = vmatpush2.msra.mxu0 0.0
        %458 = vmatprep.subr.mxu0 0.0
        %459 = vmatpush2.msra.mxu0 0.0
        %460 = vmatprep.subr.mxu0 0.0
        %461 = vmatpush2.msra.mxu0 0.0
        %462 = vmatprep.mubr.f32.mxu0 0.0
        %463 = vmatmul.mubr.f32.gmra.mxu0 %v396
        %v464 = vpop.f32.mrf.mxu0
        %v465 = vadd.f32 0.0, %v464
        %v466 = vpop.f32.mrf.mxu0
        %467 = vdwg.mxu0
        %v468 = vadd.f32 %v385, %v465
        %469 = vst.msk [vmem:[#allocation2] sm:$0xff] %vm310, %v468
        // Predicated region
        $region45: #{_ffn.1} parent=39 // pred_check
          %p470 = pneg %p285
        $region46: #{_ffn.1} parent=39 // pred_check_branch
          %472 = sbr.rel (%p470) target = $region48
        $region47: #{_ffn.1} parent=39 // pred_region
          %v473 = vld [vmem:[#allocation2] sm:$0xff]
          %474 = vst.msk [vmem:[%s267] sm:$0xff] %vm310, %v473
        $region48: #{_ffn.1} parent=39 // pred_fallthru
          _
        %s475 = sand.u32 %s164, 1
        %s476 = scalar_lea.sflag [#allocation4], %s475
        %s477 = sand.u32 %s164, 1
        %s478 = smul.addr %s477, 8
        %s479 = scalar_lea.vmem [#allocation3], %s478
        // Predicated region
        $region49: #{_ffn.1} parent=39 // pred_check
          %p480 = pneg %p174
        $region50: #{_ffn.1} parent=39 // pred_check_branch
          %482 = sbr.rel (%p480) target = $region52
        $region51: #{_ffn.1} parent=39 // pred_region
          %s484 = ssub.s32 128, 128
          %485 = vsyncadd %s476, %s484
          %s486 = smul.addr %s23, 128
          %s487 = scalar_lea.hbm %s5, %s486
          %s489 = sshll.u32 %s479, 4
          %s490 = int_to_ptr.vmem [resolvable:$true] %s489
          %492 = dma.vmem_to_hbm [thread:$0]  %s490, 128, %s487, %s476
        $region52: #{_ffn.1} parent=39 // pred_fallthru
          _
      $region40: #{_ffn.1} parent=5 // pred_fallthru
        _
      %p493 = scmp.le.s32.totalorder 2, %s14
      // Predicated region
      $region53: #{_ffn.1} parent=5 // pred_check
        %p494 = pneg %p493
      $region54: #{_ffn.1} parent=5 // pred_check_branch
        %496 = sbr.rel (%p494) target = $region56
      $region55: #{_ffn.1} parent=5 // pred_region
        %s497 = ssub.s32 %s14, 2
        // Predicated region
        $region57: #{_ffn.1} parent=55 // pred_check
          %p498 = pneg %p180
        $region58: #{_ffn.1} parent=55 // pred_check_branch
          %500 = sbr.rel (%p498) target = $region60
        $region59: #{_ffn.1} parent=55 // pred_region
          %s501 = sand.u32 %s165, 1
          %s502 = scalar_lea.sflag [#allocation4], %s501
          %s503 = sand.u32 %s165, 1
          %s504 = smul.addr %s503, 8
          %s505 = scalar_lea.vmem [#allocation3], %s504
          %506 = dma.done %s502, 128
        $region60: #{_ffn.1} parent=55 // pred_fallthru
          _
      $region56: #{_ffn.1} parent=5 // pred_fallthru
        _
    $region6: #{_ffn.1} parent=1 // loop_footer
      %s18 = sadd.s32 1, %s14
    $region7: #{_ffn.1} parent=1 // loop_footer_branch
      %13 = sbr.rel target = $region3
    $region8: #{_ffn.1} parent=1 // loop_exit
      _
    %507 = vsyncpa [#allocation4], 1
    %s508 = scalar_lea.sflag [#allocation4], 1
    %509 = vsyncpa %s508, 1

</llo_original>
